<compile_context>
chip_gen: v7x
topology: tpu7x:2x2x1
jax: 0.10.0
libtpu: 0.0.40
codegen_flags: <defaults>
</compile_context>

<pallas_src>
import functools

import jax
import jax.numpy as jnp
from jax import lax
from jax.experimental import pallas as pl
from jax.experimental.pallas import tpu as pltpu

BN_EPS = 1e-3
_ACT_DTYPE = jnp.bfloat16
_VMEM_LIMIT = 48 * 1024 * 1024  # all blocks used here are << this; safe on v5e/v6e/v7x


def _pair(v):
    return (v, v) if isinstance(v, int) else (int(v[0]), int(v[1]))


def _round_up(x, m):
    return ((x + m - 1) // m) * m


# ---------------------------------------------------------------------------
# Pallas kernels
# ---------------------------------------------------------------------------

def _mm_affine_kernel(x_ref, w_ref, shift_ref, o_ref, *, relu):
    # x_ref: (TM, K), w_ref: (K, TN) (BN scale folded), shift_ref: (1, TN) f32
    acc = jnp.dot(x_ref[...], w_ref[...], preferred_element_type=jnp.float32)
    y = acc + shift_ref[...]
    if relu:
        y = jnp.maximum(y, 0.0)
    o_ref[...] = y.astype(o_ref.dtype)


@functools.partial(jax.jit, static_argnames=("relu", "out_dtype"))
def _mm_affine(x2d, w, shift, *, relu, out_dtype):
    """(M, K) @ (K, Np) + shift (optional ReLU).  Np is a multiple of 128."""
    m, k = x2d.shape
    npad = w.shape[1]
    tm = m if m <= 512 else 512
    # N tiling: stream weight panels (double-buffered DMA), >=2 grid steps
    # whenever the padded output is wider than 128 lanes.
    tn = 256 if npad > 256 else (128 if npad == 256 else npad)
    grid = (pl.cdiv(m, tm), pl.cdiv(npad, tn))
    return pl.pallas_call(
        functools.partial(_mm_affine_kernel, relu=relu),
        out_shape=jax.ShapeDtypeStruct((m, npad), out_dtype),
        grid_spec=pltpu.PrefetchScalarGridSpec(
            num_scalar_prefetch=0,
            grid=grid,
            in_specs=[
                pl.BlockSpec((tm, k), lambda i, j: (i, 0)),
                pl.BlockSpec((k, tn), lambda i, j: (0, j)),
                pl.BlockSpec((1, tn), lambda i, j: (0, j)),
            ],
            out_specs=pl.BlockSpec((tm, tn), lambda i, j: (i, j)),
        ),
        compiler_params=pltpu.CompilerParams(
            dimension_semantics=("parallel", "parallel"),
            vmem_limit_bytes=_VMEM_LIMIT,
        ),
    )(x2d, w, shift)


def _conv_taps_kernel(x_ref, w_ref, shift_ref, o_ref, acc_ref,
                      *, kh, kw, sh, sw, rb, nrb, wps):
    # x_ref:     (1, sh*sw, hps*wps + cpad, Cin) phase-decomposed, flattened, zero-padded
    # w_ref:     (KH*KW, Cin, Coutp)   BN-scale folded weight taps (bf16)
    # shift_ref: (1, Coutp)            BN shift (f32)
    # o_ref:     (1, hob*wps, Coutp)   flattened output rows (wrapper reshapes/crops)
    # acc_ref:   (rb*wps, Coutp)       f32 VMEM accumulator
    shift = shift_ref[...]
    for blk in range(nrb):                    # static, fully visible row-block loop
        r0 = blk * rb
        acc_ref[...] = jnp.zeros_like(acc_ref)
        for di in range(kh):
            ro = di // sh
            for dj in range(kw):
                p = (di % sh) * sw + (dj % sw)
                s = (r0 + ro) * wps + dj // sw
                acc_ref[...] += jnp.dot(
                    x_ref[0, p, s:s + rb * wps, :],
                    w_ref[di * kw + dj],
                    preferred_element_type=jnp.float32)
        y = jnp.maximum(acc_ref[...] + shift, 0.0)
        o_ref[0, r0 * wps:(r0 + rb) * wps, :] = y.astype(o_ref.dtype)


@functools.partial(jax.jit,
                   static_argnames=("kh", "kw", "sh", "sw", "ph", "pw", "out_dtype"))
def _conv_taps(x, w_taps, shift, *, kh, kw, sh, sw, ph, pw, out_dtype):
    """General KHxKW conv (+shift+ReLU), tap-accumulated inside the kernel."""
    n, h, w_, cin = x.shape
    coutp = w_taps.shape[-1]
    ho = (h + 2 * ph - kh) // sh + 1
    wo = (w_ + 2 * pw - kw) // sw + 1
    cpad = (kw - 1) // sw                      # max per-tap column offset
    wps = _round_up(wo + cpad, 8)              # flattened row stride (sublane aligned)
    rb = max(1, min(ho, pl.cdiv(128, wps)))    # output rows per MXU dot block
    nrb = pl.cdiv(ho, rb)
    hob = nrb * rb
    hps = hob + (kh - 1) // sh
    hp, wp = hps * sh, wps * sw
    xp = jnp.pad(x, ((0, 0),
                     (ph, max(0, hp - h - ph)),
                     (pw, max(0, wp - w_ - pw)),
                     (0, 0)))[:, :hp, :wp, :]
    # row/column phase decomposition: stride>1 becomes contiguous in-kernel slices
    xp = xp.reshape(n, hps, sh, wps, sw, cin).transpose(0, 2, 4, 1, 3, 5)
    xp = xp.reshape(n, sh * sw, hps * wps, cin)
    if cpad:
        xp = jnp.pad(xp, ((0, 0), (0, 0), (0, cpad), (0, 0)))
    flat = hps * wps + cpad

    y = pl.pallas_call(
        functools.partial(_conv_taps_kernel, kh=kh, kw=kw, sh=sh, sw=sw,
                          rb=rb, nrb=nrb, wps=wps),
        out_shape=jax.ShapeDtypeStruct((n, hob * wps, coutp), out_dtype),
        grid_spec=pltpu.PrefetchScalarGridSpec(
            num_scalar_prefetch=0,
            grid=(n,),
            in_specs=[
                pl.BlockSpec((1, sh * sw, flat, cin), lambda b: (b, 0, 0, 0)),
                pl.BlockSpec((kh * kw, cin, coutp), lambda b: (0, 0, 0)),
                pl.BlockSpec((1, coutp), lambda b: (0, 0)),
            ],
            out_specs=pl.BlockSpec((1, hob * wps, coutp), lambda b: (b, 0, 0)),
            scratch_shapes=[pltpu.VMEM((rb * wps, coutp), jnp.float32)],
        ),
        compiler_params=pltpu.CompilerParams(
            dimension_semantics=("parallel",),
            vmem_limit_bytes=_VMEM_LIMIT,
        ),
    )(xp, w_taps, shift)
    return y.reshape(n, hob, wps, coutp)[:, :ho, :wo, :]


# ---------------------------------------------------------------------------
# One-time parameter preparation (BN fold, Cout pad, bf16 cast)
# ---------------------------------------------------------------------------

def _fold(p):
    scale = p["gamma"] / jnp.sqrt(p["var"] + BN_EPS)
    shift = p["beta"] - p["mean"] * scale
    return scale, shift


def prepare_conv(p):
    w = p["w"]                                  # (kh, kw, cin, cout) HWIO
    kh, kw, cin, cout = w.shape
    scale, shift = _fold(p)
    coutp = _round_up(cout, 128)
    wf = (w * scale[None, None, None, :])       # fold in f32, then cast
    wf = jnp.pad(wf, ((0, 0), (0, 0), (0, 0), (0, coutp - cout))).astype(_ACT_DTYPE)
    sp = jnp.pad(shift, (0, coutp - cout)).astype(jnp.float32).reshape(1, coutp)
    if kh == 1 and kw == 1:
        wv = wf.reshape(cin, coutp)
    else:
        wv = wf.reshape(kh * kw, cin, coutp)
    return dict(w=wv, shift=sp, kh=kh, kw=kw, cin=cin, cout=cout, coutp=coutp)


def prepare_group(plist, names):
    """Fuse several 1x1 BasicConv2d sharing one input into one lane-dense matmul."""
    cin = plist[0]["w"].shape[2]
    ws, shifts, couts = [], [], []
    for p in plist:
        scale, shift = _fold(p)
        cout = p["w"].shape[3]
        ws.append(p["w"].reshape(cin, cout) * scale[None, :])
        shifts.append(shift)
        couts.append(cout)
    wc = jnp.concatenate(ws, axis=1)
    sc = jnp.concatenate(shifts, axis=0)
    ctot = wc.shape[1]
    ctotp = _round_up(ctot, 128)
    wc = jnp.pad(wc, ((0, 0), (0, ctotp - ctot))).astype(_ACT_DTYPE)
    sc = jnp.pad(sc, (0, ctotp - ctot)).astype(jnp.float32).reshape(1, ctotp)
    return dict(w=wc, shift=sc, couts=tuple(couts), names=tuple(names), cin=cin)


def prepare_fc(p):
    w, b = p["w"], p["b"]
    k, out = w.shape
    outp = _round_up(out, 128)
    wp = jnp.pad(w, ((0, 0), (0, outp - out))).astype(jnp.float32)
    bp = jnp.pad(b, (0, outp - out)).astype(jnp.float32).reshape(1, outp)
    return dict(w=wp, b=bp, out=out)


_STEM = ("Conv2d_1a_3x3", "Conv2d_2a_3x3", "Conv2d_2b_3x3",
         "Conv2d_3b_1x1", "Conv2d_4a_3x3")

_GROUP_A = ("branch1x1", "branch5x5_1", "branch3x3dbl_1")
_GROUP_C = ("branch1x1", "branch7x7_1", "branch7x7dbl_1")
_GROUP_D = ("branch3x3_1", "branch7x7x3_1")
_GROUP_E = ("branch1x1", "branch3x3_1", "branch3x3dbl_1")

_BLOCK_GROUPS = {
    "Mixed_5b": _GROUP_A, "Mixed_5c": _GROUP_A, "Mixed_5d": _GROUP_A,
    "Mixed_6a": None,
    "Mixed_6b": _GROUP_C, "Mixed_6c": _GROUP_C, "Mixed_6d": _GROUP_C, "Mixed_6e": _GROUP_C,
    "Mixed_7a": _GROUP_D,
    "Mixed_7b": _GROUP_E, "Mixed_7c": _GROUP_E,
}


def prepare_inception3(raw):
    prep = {}
    for nm in _STEM:
        prep[nm] = prepare_conv(raw[nm])
    for blk, grp in _BLOCK_GROUPS.items():
        rawb = raw[blk]
        members = set(grp) if grp else set()
        pb = {nm: prepare_conv(p) for nm, p in rawb.items() if nm not in members}
        if grp:
            pb["__group__"] = prepare_group([rawb[nm] for nm in grp], grp)
        prep[blk] = pb
    prep["fc"] = prepare_fc(raw["fc"])
    return prep


# ---------------------------------------------------------------------------
# Pallas-path layer application
# ---------------------------------------------------------------------------

def apply_conv(prep, x, *, stride=1, padding=0):
    sh, sw = _pair(stride)
    ph, pw = _pair(padding)
    xb = x.astype(_ACT_DTYPE)
    if prep["kh"] == 1 and prep["kw"] == 1 and (sh, sw, ph, pw) == (1, 1, 0, 0):
        n, h, wd, cin = x.shape
        y = _mm_affine(xb.reshape(n * h * wd, cin), prep["w"], prep["shift"],
                       relu=True, out_dtype=_ACT_DTYPE)
        y = y.reshape(n, h, wd, prep["coutp"])
    else:
        wt = prep["w"]
        if wt.ndim == 2:
            wt = wt.reshape(1, *wt.shape)
        y = _conv_taps(xb, wt, prep["shift"],
                       kh=prep["kh"], kw=prep["kw"], sh=sh, sw=sw, ph=ph, pw=pw,
                       out_dtype=_ACT_DTYPE)
    return y[..., :prep["cout"]]


def apply_group(prep, x):
    n, h, wd, cin = x.shape
    y = _mm_affine(x.astype(_ACT_DTYPE).reshape(n * h * wd, cin),
                   prep["w"], prep["shift"], relu=True, out_dtype=_ACT_DTYPE)
    y = y.reshape(n, h, wd, prep["w"].shape[1])
    outs, off = [], 0
    for c in prep["couts"]:
        outs.append(y[..., off:off + c])
        off += c
    return outs


def apply_fc(prep, feat_f32):
    y = _mm_affine(feat_f32.astype(jnp.float32), prep["w"], prep["b"],
                   relu=False, out_dtype=jnp.float32)
    return y[:, :prep["out"]]


# ---------------------------------------------------------------------------
# Pure-JAX f32 reference path (for validation)
# ---------------------------------------------------------------------------

@functools.partial(jax.jit, static_argnames=("stride", "padding"))
def ref_conv_bn_relu(params, x, *, stride=1, padding=0):
    sh, sw = _pair(stride)
    ph, pw = _pair(padding)
    y = lax.conv_general_dilated(
        x.astype(jnp.float32), params["w"].astype(jnp.float32),
        window_strides=(sh, sw), padding=[(ph, ph), (pw, pw)],
        dimension_numbers=("NHWC", "HWIO", "NHWC"))
    scale, shift = _fold(params)
    return jnp.maximum(y * scale + shift, 0.0)


# ---------------------------------------------------------------------------
# Pooling glue (shared by both paths; stays in the activation dtype)
# TODO(synk): max/avg/adaptive pooling and channel concat stay in XLA glue.
# ---------------------------------------------------------------------------

def avg_pool_3x3_s1_p1(x):
    # F.avg_pool2d(kernel_size=3, stride=1, padding=1), count_include_pad=True
    s = lax.reduce_window(x, jnp.zeros((), x.dtype), lax.add,
                          (1, 3, 3, 1), (1, 1, 1, 1),
                          [(0, 0), (1, 1), (1, 1), (0, 0)])
    return s * jnp.asarray(1.0 / 9.0, s.dtype)


def max_pool_3x3_s2(x):
    return lax.reduce_window(x, jnp.asarray(-jnp.inf, x.dtype), lax.max,
                             (1, 3, 3, 1), (1, 2, 2, 1), "VALID")


# ---------------------------------------------------------------------------
# Inception blocks (NHWC), parameterized by per-block conv/group closures
# ---------------------------------------------------------------------------

def inception_a(conv, group, x):
    b1, b5, b3d = group(_GROUP_A, x)
    b5 = conv("branch5x5_2", b5, padding=2)
    b3d = conv("branch3x3dbl_2", b3d, padding=1)
    b3d = conv("branch3x3dbl_3", b3d, padding=1)
    bp = conv("branch_pool", avg_pool_3x3_s1_p1(x))
    return jnp.concatenate([b1, b5, b3d, bp], axis=-1)


def inception_b(conv, group, x):
    b3 = conv("branch3x3", x, stride=2)
    bd = conv("branch3x3dbl_1", x)
    bd = conv("branch3x3dbl_2", bd, padding=1)
    bd = conv("branch3x3dbl_3", bd, stride=2)
    bp = max_pool_3x3_s2(x)
    return jnp.concatenate([b3, bd, bp], axis=-1)


def inception_c(conv, group, x):
    b1, b7, b7d = group(_GROUP_C, x)
    b7 = conv("branch7x7_2", b7, padding=(0, 3))
    b7 = conv("branch7x7_3", b7, padding=(3, 0))
    b7d = conv("branch7x7dbl_2", b7d, padding=(3, 0))
    b7d = conv("branch7x7dbl_3", b7d, padding=(0, 3))
    b7d = conv("branch7x7dbl_4", b7d, padding=(3, 0))
    b7d = conv("branch7x7dbl_5", b7d, padding=(0, 3))
    bp = conv("branch_pool", avg_pool_3x3_s1_p1(x))
    return jnp.concatenate([b1, b7, b7d, bp], axis=-1)


def inception_d(conv, group, x):
    b3, b7 = group(_GROUP_D, x)
    b3 = conv("branch3x3_2", b3, stride=2)
    b7 = conv("branch7x7x3_2", b7, padding=(0, 3))
    b7 = conv("branch7x7x3_3", b7, padding=(3, 0))
    b7 = conv("branch7x7x3_4", b7, stride=2)
    bp = max_pool_3x3_s2(x)
    return jnp.concatenate([b3, b7, bp], axis=-1)


def inception_e(conv, group, x):
    b1, b3_1, b3d_1 = group(_GROUP_E, x)
    b3 = jnp.concatenate([conv("branch3x3_2a", b3_1, padding=(0, 1)),
                          conv("branch3x3_2b", b3_1, padding=(1, 0))], axis=-1)
    b3d = conv("branch3x3dbl_2", b3d_1, padding=1)
    b3d = jnp.concatenate([conv("branch3x3dbl_3a", b3d, padding=(0, 1)),
                           conv("branch3x3dbl_3b", b3d, padding=(1, 0))], axis=-1)
    bp = conv("branch_pool", avg_pool_3x3_s1_p1(x))
    return jnp.concatenate([b1, b3, b3d, bp], axis=-1)


_BLOCK_FNS = [("Mixed_5b", inception_a), ("Mixed_5c", inception_a), ("Mixed_5d", inception_a),
              ("Mixed_6a", inception_b),
              ("Mixed_6b", inception_c), ("Mixed_6c", inception_c),
              ("Mixed_6d", inception_c), ("Mixed_6e", inception_c),
              ("Mixed_7a", inception_d), ("Mixed_7b", inception_e), ("Mixed_7c", inception_e)]


def _forward(x_nchw, conv, block, fc, act_dtype):
    """Inference forward of Inception3; returns (feature, logits) like eval-mode PyTorch."""
    # TODO(synk): transform_input preprocessing (constructor default False) not implemented.
    # TODO(synk): InceptionAux head and F.dropout are training-only; eval forward skips them.
    x = jnp.transpose(x_nchw, (0, 2, 3, 1)).astype(act_dtype)  # NCHW -> NHWC once
    x = conv("Conv2d_1a_3x3", x, stride=2)
    x = conv("Conv2d_2a_3x3", x)
    x = conv("Conv2d_2b_3x3", x, padding=1)
    x = max_pool_3x3_s2(x)
    x = conv("Conv2d_3b_1x1", x)
    x = conv("Conv2d_4a_3x3", x)
    x = max_pool_3x3_s2(x)
    for name, fn in _BLOCK_FNS:
        x = block(name, fn, x)
    feat = jnp.mean(x.astype(jnp.float32), axis=(1, 2))  # adaptive_avg_pool2d((1,1)) + flatten
    logits = fc(feat)
    return feat, logits


def forward_pallas(prep, x_nchw):
    def conv(name, x, **kw):
        return apply_conv(prep[name], x, **kw)

    def block(name, fn, x):
        pb = prep[name]

        def bconv(cname, xx, **kw):
            return apply_conv(pb[cname], xx, **kw)

        def bgroup(names, xx):
            g = pb["__group__"]
            assert tuple(names) == g["names"]
            return apply_group(g, xx)

        return fn(bconv, bgroup, x)

    def fc(feat):
        return apply_fc(prep["fc"], feat)

    return _forward(x_nchw, conv, block, fc, _ACT_DTYPE)


def forward_ref(raw, x_nchw):
    def conv(name, x, **kw):
        return ref_conv_bn_relu(raw[name], x, **kw)

    def block(name, fn, x):
        rb = raw[name]

        def bconv(cname, xx, **kw):
            return ref_conv_bn_relu(rb[cname], xx, **kw)

        def bgroup(names, xx):
            return [ref_conv_bn_relu(rb[n], xx) for n in names]

        return fn(bconv, bgroup, x)

    def fc(feat):
        return feat.astype(jnp.float32) @ raw["fc"]["w"] + raw["fc"]["b"]

    return _forward(x_nchw, conv, block, fc, jnp.float32)


# ---------------------------------------------------------------------------
# Parameter construction
# ---------------------------------------------------------------------------

def init_bconv(key, cin, cout, kh, kw):
    kw_, kb = jax.random.split(key)
    fan_in = cin * kh * kw
    k1, k2, k3, k4 = jax.random.split(kb, 4)
    return dict(
        w=jax.random.normal(kw_, (kh, kw, cin, cout), jnp.float32) * (2.0 / fan_in) ** 0.5,
        gamma=jax.random.uniform(k1, (cout,), jnp.float32, minval=0.8, maxval=1.2),
        beta=jax.random.normal(k2, (cout,), jnp.float32) * 0.05,
        mean=jax.random.normal(k3, (cout,), jnp.float32) * 0.05,
        var=jax.random.uniform(k4, (cout,), jnp.float32, minval=0.8, maxval=1.2),
    )


def init_inception3(key, num_classes=8):
    keys = iter(jax.random.split(key, 256))

    def bc(cin, cout, kh, kw):
        return init_bconv(next(keys), cin, cout, kh, kw)

    def inc_a(cin, pf):
        return dict(branch1x1=bc(cin, 64, 1, 1), branch5x5_1=bc(cin, 48, 1, 1),
                    branch5x5_2=bc(48, 64, 5, 5), branch3x3dbl_1=bc(cin, 64, 1, 1),
                    branch3x3dbl_2=bc(64, 96, 3, 3), branch3x3dbl_3=bc(96, 96, 3, 3),
                    branch_pool=bc(cin, pf, 1, 1))

    def inc_b(cin):
        return dict(branch3x3=bc(cin, 384, 3, 3), branch3x3dbl_1=bc(cin, 64, 1, 1),
                    branch3x3dbl_2=bc(64, 96, 3, 3), branch3x3dbl_3=bc(96, 96, 3, 3))

    def inc_c(cin, c7):
        return dict(branch1x1=bc(cin, 192, 1, 1), branch7x7_1=bc(cin, c7, 1, 1),
                    branch7x7_2=bc(c7, c7, 1, 7), branch7x7_3=bc(c7, 192, 7, 1),
                    branch7x7dbl_1=bc(cin, c7, 1, 1), branch7x7dbl_2=bc(c7, c7, 7, 1),
                    branch7x7dbl_3=bc(c7, c7, 1, 7), branch7x7dbl_4=bc(c7, c7, 7, 1),
                    branch7x7dbl_5=bc(c7, 192, 1, 7), branch_pool=bc(cin, 192, 1, 1))

    def inc_d(cin):
        return dict(branch3x3_1=bc(cin, 192, 1, 1), branch3x3_2=bc(192, 320, 3, 3),
                    branch7x7x3_1=bc(cin, 192, 1, 1), branch7x7x3_2=bc(192, 192, 1, 7),
                    branch7x7x3_3=bc(192, 192, 7, 1), branch7x7x3_4=bc(192, 192, 3, 3))

    def inc_e(cin):
        return dict(branch1x1=bc(cin, 320, 1, 1), branch3x3_1=bc(cin, 384, 1, 1),
                    branch3x3_2a=bc(384, 384, 1, 3), branch3x3_2b=bc(384, 384, 3, 1),
                    branch3x3dbl_1=bc(cin, 448, 1, 1), branch3x3dbl_2=bc(448, 384, 3, 3),
                    branch3x3dbl_3a=bc(384, 384, 1, 3), branch3x3dbl_3b=bc(384, 384, 3, 1),
                    branch_pool=bc(cin, 192, 1, 1))

    kfw, kfb = jax.random.split(next(keys))
    return dict(
        Conv2d_1a_3x3=bc(3, 32, 3, 3), Conv2d_2a_3x3=bc(32, 32, 3, 3),
        Conv2d_2b_3x3=bc(32, 64, 3, 3), Conv2d_3b_1x1=bc(64, 80, 1, 1),
        Conv2d_4a_3x3=bc(80, 192, 3, 3),
        Mixed_5b=inc_a(192, 32), Mixed_5c=inc_a(256, 64), Mixed_5d=inc_a(288, 64),
        Mixed_6a=inc_b(288),
        Mixed_6b=inc_c(768, 128), Mixed_6c=inc_c(768, 160),
        Mixed_6d=inc_c(768, 160), Mixed_6e=inc_c(768, 192),
        Mixed_7a=inc_d(768), Mixed_7b=inc_e(1280), Mixed_7c=inc_e(2048),
        fc=dict(w=jax.random.normal(kfw, (2048, num_classes), jnp.float32) / 2048.0 ** 0.5,
                b=jax.random.normal(kfb, (num_classes,), jnp.float32) * 0.01),
    )


# ---------------------------------------------------------------------------
# Main
# ---------------------------------------------------------------------------

if __name__ == "__main__":
    root = jax.random.PRNGKey(0)
    k_params, k_x, k_unit_x, k_unit_p = jax.random.split(root, 4)

    num_classes = 8
    raw_params = init_inception3(k_params, num_classes=num_classes)
    prep_params = prepare_inception3(raw_params)  # BN fold / pad / cast done ONCE

    # --- unit checks of the fused conv+BN+ReLU kernel on each code path ---
    xt = jax.random.normal(k_unit_x, (2, 9, 9, 16), jnp.float32)
    unit_keys = jax.random.split(k_unit_p, 4)
    for uk, (kh, kw, st, pad) in zip(
            unit_keys, [(1, 1, 1, 0), (3, 3, 1, 1), (3, 3, 2, 0), (1, 7, 1, (0, 3))]):
        pc = init_bconv(uk, 16, 24, kh, kw)
        got = apply_conv(prepare_conv(pc), xt, stride=st, padding=pad).astype(jnp.float32)
        want = ref_conv_bn_relu(pc, xt, stride=st, padding=pad)
        assert got.shape == want.shape
        err = float(jnp.max(jnp.abs(got - want)) / (jnp.max(jnp.abs(want)) + 1e-6))
        assert err < 0.03, f"BasicConv2d mismatch k=({kh},{kw}) s={st} p={pad}: {err}"

    # --- full Inception3 inference forward ---
    N, H, W = 2, 75, 75  # smallest spatial size the Inception3 stem downsampling admits
    x = jax.random.normal(k_x, (N, 3, H, W), jnp.float32)

    feat, logits = jax.block_until_ready(forward_pallas(prep_params, x))
    assert feat.shape == (N, 2048), feat.shape
    assert logits.shape == (N, num_classes), logits.shape
    assert bool(jnp.all(jnp.isfinite(feat))) and bool(jnp.all(jnp.isfinite(logits)))

    feat_r, logits_r = forward_ref(raw_params, x)

    def _nerr(a, b):
        a = a.astype(jnp.float32)
        return float(jnp.max(jnp.abs(a - b)) / (jnp.max(jnp.abs(b)) + 1e-6))

    ef, el = _nerr(feat, feat_r), _nerr(logits, logits_r)
    # loose tolerance: ~48 bf16 conv layers vs an f32 reference
    assert ef < 0.15 and el < 0.15, f"end-to-end mismatch: feat={ef} logits={el}"

    print("KERNEL_OK")
</pallas_src>

<mosaic_0001>
module attributes {stable_mosaic.version = 11 : i64} {
  func.func @_mm_affine_kernel(%arg0: i32, %arg1: i32, %arg2: memref<162x16xbf16, #tpu.memory_space<vmem>>, %arg3: memref<16x128xbf16, #tpu.memory_space<vmem>>, %arg4: memref<1x128xf32, #tpu.memory_space<vmem>>, %arg5: memref<162x128xbf16, #tpu.memory_space<vmem>>) attributes {dimension_semantics = [#tpu.dimension_semantics<parallel>, #tpu.dimension_semantics<parallel>], iteration_bounds = array<i64: 1, 1>, scalar_prefetch = 0 : i64, scratch_operands = 0 : i64, tpu.core_type = #tpu.core_type<tc>, window_params = [{transform_indices = @transform_0, window_bounds = array<i64: 162, 16>}, {transform_indices = @transform_1, window_bounds = array<i64: 16, 128>}, {transform_indices = @transform_2, window_bounds = array<i64: 1, 128>}, {transform_indices = @transform_3, window_bounds = array<i64: 162, 128>}]} {
    %c0 = arith.constant 0 : index
    %c0_0 = arith.constant 0 : index
    %0 = vector.load %arg2[%c0, %c0_0] : memref<162x16xbf16, #tpu.memory_space<vmem>>, vector<162x16xbf16>
    %c0_1 = arith.constant 0 : index
    %c0_2 = arith.constant 0 : index
    %1 = vector.load %arg3[%c0_1, %c0_2] : memref<16x128xbf16, #tpu.memory_space<vmem>>, vector<16x128xbf16>
    %cst = arith.constant dense<0.000000e+00> : vector<162x128xf32>
    %2 = tpu.matmul %0, %1, %cst {dimension_numbers = #tpu.dot_dimension_numbers<[1], [0], [0], [1], [0, 0, 1, 1], [], []>} : vector<162x16xbf16>, vector<16x128xbf16>, vector<162x128xf32> -> vector<162x128xf32>
    %c0_3 = arith.constant 0 : index
    %c0_4 = arith.constant 0 : index
    %3 = vector.load %arg4[%c0_3, %c0_4] : memref<1x128xf32, #tpu.memory_space<vmem>>, vector<1x128xf32>
    %4 = vector.broadcast %3 : vector<1x128xf32> to vector<162x128xf32>
    %5 = arith.addf %2, %4 : vector<162x128xf32>
    %cst_5 = arith.constant 0.000000e+00 : f32
    %6 = vector.broadcast %cst_5 : f32 to vector<162x128xf32>
    %7 = arith.maximumf %5, %6 : vector<162x128xf32>
    %8 = arith.truncf %7 : vector<162x128xf32> to vector<162x128xbf16>
    %c0_6 = arith.constant 0 : index
    %c0_7 = arith.constant 0 : index
    %9 = vector.load %arg5[%c0_6, %c0_7] : memref<162x128xbf16, #tpu.memory_space<vmem>>, vector<162x128xbf16>
    tpu.vector_store %arg5[%c0_6, %c0_7], %8 {strides = array<i32>} : memref<162x128xbf16, #tpu.memory_space<vmem>>, vector<162x128xbf16>,
    return
  }
  func.func @transform_0(%arg0: i32, %arg1: i32) -> (i32, i32) {
    %c0_i32 = arith.constant 0 : i32
    %c0_i32_0 = arith.constant 0 : i32
    return %arg0, %c0_i32 : i32, i32
  }
  func.func @transform_1(%arg0: i32, %arg1: i32) -> (i32, i32) {
    %c0_i32 = arith.constant 0 : i32
    %c0_i32_0 = arith.constant 0 : i32
    return %c0_i32, %arg1 : i32, i32
  }
  func.func @transform_2(%arg0: i32, %arg1: i32) -> (i32, i32) {
    %c0_i32 = arith.constant 0 : i32
    %c0_i32_0 = arith.constant 0 : i32
    return %c0_i32, %arg1 : i32, i32
  }
  func.func @transform_3(%arg0: i32, %arg1: i32) -> (i32, i32) {
    %c0_i32 = arith.constant 0 : i32
    return %arg0, %arg1 : i32, i32
  }
}

</mosaic_0001>

<llo_original>
// kernel: _mm_affine.1
$region0: #{_mm_affine.1}
  #allocation0 [shape = 'u32[]', space=smem, size = 0x4, offset = 0x4, fixed_abs, tag = 'smem constant byte address 0x4 - core index']
  #allocation1 [shape = 'u32[144,128]{1,0:T(1,128)}', space=vmem, size = 0x12000, scoped, tag = 'internal scratch']
  %s0 = inlined_call_operand.vmem [shape: bf16[162,16], index: 0, kind: input, shape index: {}]
  %s1 = inlined_call_operand.vmem [shape: bf16[16,128], index: 1, kind: input, shape index: {}]
  %s2 = inlined_call_operand.vmem [shape: f32[1,128], index: 2, kind: input, shape index: {}]
  %s3 = inlined_call_operand.hbm [shape: bf16[162,128], index: 3, kind: output, shape index: {}]
  %s4 = sld [smem:[#allocation0]]
  $region22: #{_mm_affine.1} parent=0
    _
  %s6 = ssub.s32 1, %s4
  %s7 = scalar_select 0, %s6, %s4
  $region1: #{_mm_affine.1} parent=0
    #allocation2 [shape = 'u8[43008]{0}', space=vmem, size = 0xa800, scoped, tag = 'output window, operand 0, single buffered']
    #allocation3 [shape = 's32[1]{0}', space=sflag, size = 0x4, scoped, tag = 'scoped memory for _mm_affine.1']
    %8 = vsyncpa [#allocation3], 0
    // Predicated region
    $region2: #{_mm_affine.1} parent=1 // pred_check
      _
    $region3: #{_mm_affine.1} parent=1 // pred_check_branch
      %10 = sbr.rel (0) target = $region5
    $region4: #{_mm_affine.1} parent=1 // pred_region
      _
    $region5: #{_mm_affine.1} parent=1 // pred_fallthru
      _
    // Predicated region
    $region6: #{_mm_affine.1} parent=1 // pred_check
      _
    $region7: #{_mm_affine.1} parent=1 // pred_check_branch
      %12 = sbr.rel (0) target = $region9
    $region8: #{_mm_affine.1} parent=1 // pred_region
      _
    $region9: #{_mm_affine.1} parent=1 // pred_fallthru
      _
    // Predicated region
    $region10: #{_mm_affine.1} parent=1 // pred_check
      _
    $region11: #{_mm_affine.1} parent=1 // pred_check_branch
      %14 = sbr.rel (0) target = $region13
    $region12: #{_mm_affine.1} parent=1 // pred_region
      _
    $region13: #{_mm_affine.1} parent=1 // pred_fallthru
      _
    %v16 = vld [vmem:[%s0] sm:$0xf]
    %v17 = vld [vmem:[%s0 + $0x4] sm:$0xf]
    %v18 = vld [vmem:[%s0 + $0x8] sm:$0xf]
    %v19 = vld [vmem:[%s0 + $0xc] sm:$0xf]
    %v20 = vld [vmem:[%s0 + $0x10] sm:$0xf]
    %v21 = vld [vmem:[%s0 + $0x14] sm:$0xf]
    %v22 = vld [vmem:[%s0 + $0x18] sm:$0xf]
    %v23 = vld [vmem:[%s0 + $0x1c] sm:$0xf]
    %v24 = vld [vmem:[%s0 + $0x20] sm:$0xf]
    %v25 = vld [vmem:[%s0 + $0x24] sm:$0xf]
    %v26 = vld [vmem:[%s0 + $0x28] sm:$0xf]
    %v27 = vld [vmem:[%s0 + $0x2c] sm:$0xf]
    %v28 = vld [vmem:[%s0 + $0x30] sm:$0xf]
    %v29 = vld [vmem:[%s0 + $0x34] sm:$0xf]
    %v30 = vld [vmem:[%s0 + $0x38] sm:$0xf]
    %v31 = vld [vmem:[%s0 + $0x3c] sm:$0xf]
    %v32 = vld [vmem:[%s0 + $0x40] sm:$0xf]
    %v33 = vld [vmem:[%s0 + $0x44] sm:$0xf]
    %v34 = vld [vmem:[%s0 + $0x48] sm:$0xf]
    %v35 = vld [vmem:[%s0 + $0x4c] sm:$0xf]
    %v36 = vld [vmem:[%s0 + $0x50] sm:$0x1]
    %v37 = vld [vmem:[%s1] sm:$0xf]
    %v38 = vld [vmem:[%s1 + $0x4] sm:$0xf]
    %v39 = vld [vmem:[%s2] sm:$0x1]
    %v41 = vlaneseq
    %v42 = vshrl.u32 %v41, 7
    %v43 = vsub.s32 0, %v42
    %v44 = vrot.slane %v39, %v43
    %v67 = vunpack.c.l.b16 %v16
    %v68 = vunpack.c.l.b16 %v17
    %v69 = vunpack.c.l.b16 %v18
    %v70 = vunpack.c.l.b16 %v19
    %v71 = vunpack.c.l.b16 %v20
    %v72 = vunpack.c.l.b16 %v21
    %v73 = vunpack.c.l.b16 %v22
    %v74 = vunpack.c.l.b16 %v23
    %v75 = vunpack.c.l.b16 %v24
    %v76 = vunpack.c.l.b16 %v25
    %v77 = vunpack.c.l.b16 %v26
    %v78 = vunpack.c.l.b16 %v27
    %v79 = vunpack.c.l.b16 %v28
    %v80 = vunpack.c.l.b16 %v29
    %v81 = vunpack.c.l.b16 %v30
    %v82 = vunpack.c.l.b16 %v31
    %v83 = vunpack.c.l.b16 %v32
    %v84 = vunpack.c.l.b16 %v33
    %v85 = vunpack.c.l.b16 %v34
    %v86 = vunpack.c.l.b16 %v35
    %v87 = vunpack.c.l.b16 %v36
    %v88 = vpack.c.b16 %v68, %v67
    %v89 = vpack.c.b16 %v70, %v69
    %v90 = vpack.c.b16 %v72, %v71
    %v91 = vpack.c.b16 %v74, %v73
    %v92 = vpack.c.b16 %v76, %v75
    %v93 = vpack.c.b16 %v78, %v77
    %v94 = vpack.c.b16 %v80, %v79
    %v95 = vpack.c.b16 %v82, %v81
    %v96 = vpack.c.b16 %v84, %v83
    %v97 = vpack.c.b16 %v86, %v85
    %v98 = vpack.c.b16 %v87, %v87
    %v101 = vunpack.c.l.b16 %v37
    %v102 = vunpack.c.l.b16 %v38
    %v103 = vpack.c.b16 %v102, %v101
    %vm105 = vcmask 130048
    %v107 = vsel %vm105, %v88, 0
    %v110 = vsel %vm105, %v89, 0
    %v113 = vsel %vm105, %v90, 0
    %v116 = vsel %vm105, %v91, 0
    %v119 = vsel %vm105, %v92, 0
    %v122 = vsel %vm105, %v93, 0
    %v125 = vsel %vm105, %v94, 0
    %v128 = vsel %vm105, %v95, 0
    %v131 = vsel %vm105, %v96, 0
    %v134 = vsel %vm105, %v97, 0
    %v137 = vsel %vm105, %v98, 0
    %139 = vmatprep.subr.bf16.mxu0 0
    %140 = vmatpush1.bf16.msra.mxu0 %v103
    %141 = vmatprep.subr.bf16.mxu0 0
    %142 = vmatpush1.bf16.msra.mxu0 0
    %143 = vmatprep.subr.bf16.mxu0 0
    %144 = vmatpush1.bf16.msra.mxu0 0
    %145 = vmatprep.subr.bf16.mxu0 0
    %146 = vmatpush1.bf16.msra.mxu0 0
    %147 = vmatprep.subr.bf16.mxu0 0
    %148 = vmatpush1.bf16.msra.mxu0 0
    %149 = vmatprep.subr.bf16.mxu0 0
    %150 = vmatpush1.bf16.msra.mxu0 0
    %151 = vmatprep.subr.bf16.mxu0 0
    %152 = vmatpush1.bf16.msra.mxu0 0
    %153 = vmatprep.subr.bf16.mxu0 0
    %154 = vmatpush1.bf16.msra.mxu0 0
    %155 = vmatprep.subr.bf16.mxu0 0
    %156 = vmatpush1.bf16.msra.mxu0 0
    %157 = vmatprep.subr.bf16.mxu0 0
    %158 = vmatpush1.bf16.msra.mxu0 0
    %159 = vmatprep.subr.bf16.mxu0 0
    %160 = vmatpush1.bf16.msra.mxu0 0
    %161 = vmatprep.subr.bf16.mxu0 0
    %162 = vmatpush1.bf16.msra.mxu0 0
    %163 = vmatprep.subr.bf16.mxu0 0
    %164 = vmatpush1.bf16.msra.mxu0 0
    %165 = vmatprep.subr.bf16.mxu0 0
    %166 = vmatpush1.bf16.msra.mxu0 0
    %167 = vmatprep.subr.bf16.mxu0 0
    %168 = vmatpush1.bf16.msra.mxu0 0
    %169 = vmatprep.subr.bf16.mxu0 0
    %170 = vmatpush1.bf16.msra.mxu0 0
    %171 = vmatprep.mubr.bf16.mxu0 0
    %172 = vmatmul.mubr.bf16.gmra.mrb[0].mxu0 %v107
    %v173 = vpop.f32.mrb[0].mxu0
    %v174 = vadd.f32 %v44, %v173
    %v175 = vpop.f32.mrb[0].mxu0
    %v176 = vpop.f32.mrb[0].mxu0
    %v177 = vadd.f32 %v44, %v176
    %v178 = vpop.f32.mrb[0].mxu0
    %179 = vmatprep.mubr.bf16.mxu0 0
    %180 = vmatmul.mubr.bf16.gmra.mrb[0].mxu0 %v110
    %v181 = vpop.f32.mrb[0].mxu0
    %v182 = vadd.f32 %v44, %v181
    %v183 = vpop.f32.mrb[0].mxu0
    %v184 = vpop.f32.mrb[0].mxu0
    %v185 = vadd.f32 %v44, %v184
    %v186 = vpop.f32.mrb[0].mxu0
    %187 = vmatprep.mubr.bf16.mxu0 0
    %188 = vmatmul.mubr.bf16.gmra.mrb[0].mxu0 %v113
    %v189 = vpop.f32.mrb[0].mxu0
    %v190 = vadd.f32 %v44, %v189
    %v191 = vpop.f32.mrb[0].mxu0
    %v192 = vpop.f32.mrb[0].mxu0
    %v193 = vadd.f32 %v44, %v192
    %v194 = vpop.f32.mrb[0].mxu0
    %195 = vmatprep.mubr.bf16.mxu0 0
    %196 = vmatmul.mubr.bf16.gmra.mrb[0].mxu0 %v116
    %v197 = vpop.f32.mrb[0].mxu0
    %v198 = vadd.f32 %v44, %v197
    %v199 = vpop.f32.mrb[0].mxu0
    %v200 = vpop.f32.mrb[0].mxu0
    %v201 = vadd.f32 %v44, %v200
    %v202 = vpop.f32.mrb[0].mxu0
    %203 = vmatprep.mubr.bf16.mxu0 0
    %204 = vmatmul.mubr.bf16.gmra.mrb[0].mxu0 %v119
    %v205 = vpop.f32.mrb[0].mxu0
    %v206 = vadd.f32 %v44, %v205
    %v207 = vpop.f32.mrb[0].mxu0
    %v208 = vpop.f32.mrb[0].mxu0
    %v209 = vadd.f32 %v44, %v208
    %v210 = vpop.f32.mrb[0].mxu0
    %211 = vmatprep.mubr.bf16.mxu0 0
    %212 = vmatmul.mubr.bf16.gmra.mrb[0].mxu0 %v122
    %v213 = vpop.f32.mrb[0].mxu0
    %v214 = vadd.f32 %v44, %v213
    %v215 = vpop.f32.mrb[0].mxu0
    %v216 = vpop.f32.mrb[0].mxu0
    %v217 = vadd.f32 %v44, %v216
    %v218 = vpop.f32.mrb[0].mxu0
    %219 = vmatprep.mubr.bf16.mxu0 0
    %220 = vmatmul.mubr.bf16.gmra.mrb[0].mxu0 %v125
    %v221 = vpop.f32.mrb[0].mxu0
    %v222 = vadd.f32 %v44, %v221
    %v223 = vpop.f32.mrb[0].mxu0
    %v224 = vpop.f32.mrb[0].mxu0
    %v225 = vadd.f32 %v44, %v224
    %v226 = vpop.f32.mrb[0].mxu0
    %227 = vmatprep.mubr.bf16.mxu0 0
    %228 = vmatmul.mubr.bf16.gmra.mrb[0].mxu0 %v128
    %v229 = vpop.f32.mrb[0].mxu0
    %v230 = vadd.f32 %v44, %v229
    %v231 = vpop.f32.mrb[0].mxu0
    %v232 = vpop.f32.mrb[0].mxu0
    %v233 = vadd.f32 %v44, %v232
    %v234 = vpop.f32.mrb[0].mxu0
    %235 = vmatprep.mubr.bf16.mxu0 0
    %236 = vmatmul.mubr.bf16.gmra.mrb[0].mxu0 %v131
    %v237 = vpop.f32.mrb[0].mxu0
    %v238 = vadd.f32 %v44, %v237
    %v239 = vpop.f32.mrb[0].mxu0
    %v240 = vpop.f32.mrb[0].mxu0
    %v241 = vadd.f32 %v44, %v240
    %v242 = vpop.f32.mrb[0].mxu0
    %243 = vmatprep.mubr.bf16.mxu0 0
    %244 = vmatmul.mubr.bf16.gmra.mrb[0].mxu0 %v134
    %v245 = vpop.f32.mrb[0].mxu0
    %v246 = vadd.f32 %v44, %v245
    %v247 = vpop.f32.mrb[0].mxu0
    %v248 = vpop.f32.mrb[0].mxu0
    %v249 = vadd.f32 %v44, %v248
    %v250 = vpop.f32.mrb[0].mxu0
    %251 = vmatprep.mubr.bf16.mxu0 0
    %252 = vmatmul.mubr.bf16.gmra.mrb[0].mxu0 %v137
    %v253 = vpop.f32.mrb[0].mxu0
    %v254 = vadd.f32 %v44, %v253
    %v255 = vpop.f32.mrb[0].mxu0
    %v256 = vpop.f32.mrb[0].mxu0
    %v257 = vpop.f32.mrb[0].mxu0
    %258 = vdwg.mxu0
    %v259 = vmax.f32 %v174, 0.0
    %v260 = vmax.f32 %v177, 0.0
    %v261 = vmax.f32 %v182, 0.0
    %v262 = vmax.f32 %v185, 0.0
    %v263 = vmax.f32 %v190, 0.0
    %v264 = vmax.f32 %v193, 0.0
    %v265 = vmax.f32 %v198, 0.0
    %v266 = vmax.f32 %v201, 0.0
    %v267 = vmax.f32 %v206, 0.0
    %v268 = vmax.f32 %v209, 0.0
    %v269 = vmax.f32 %v214, 0.0
    %v270 = vmax.f32 %v217, 0.0
    %v271 = vmax.f32 %v222, 0.0
    %v272 = vmax.f32 %v225, 0.0
    %v273 = vmax.f32 %v230, 0.0
    %v274 = vmax.f32 %v233, 0.0
    %v275 = vmax.f32 %v238, 0.0
    %v276 = vmax.f32 %v241, 0.0
    %v277 = vmax.f32 %v246, 0.0
    %v278 = vmax.f32 %v249, 0.0
    %v279 = vmax.f32 %v254, 0.0
    %v280 = vpack.c.bf16 %v260, %v259
    %v281 = vpack.c.bf16 %v262, %v261
    %v282 = vpack.c.bf16 %v264, %v263
    %v283 = vpack.c.bf16 %v266, %v265
    %v284 = vpack.c.bf16 %v268, %v267
    %v285 = vpack.c.bf16 %v270, %v269
    %v286 = vpack.c.bf16 %v272, %v271
    %v287 = vpack.c.bf16 %v274, %v273
    %v288 = vpack.c.bf16 %v276, %v275
    %v289 = vpack.c.bf16 %v278, %v277
    %v290 = vpack.c.bf16 %v279, %v279
    %v302 = vunpack.c.l.b16 %v280
    %v303 = vunpack.c.h.b16 %v280
    %v304 = vunpack.c.l.b16 %v281
    %v305 = vunpack.c.h.b16 %v281
    %v306 = vunpack.c.l.b16 %v282
    %v307 = vunpack.c.h.b16 %v282
    %v308 = vunpack.c.l.b16 %v283
    %v309 = vunpack.c.h.b16 %v283
    %v310 = vunpack.c.l.b16 %v284
    %v311 = vunpack.c.h.b16 %v284
    %v312 = vunpack.c.l.b16 %v285
    %v313 = vunpack.c.h.b16 %v285
    %v314 = vunpack.c.l.b16 %v286
    %v315 = vunpack.c.h.b16 %v286
    %v316 = vunpack.c.l.b16 %v287
    %v317 = vunpack.c.h.b16 %v287
    %v318 = vunpack.c.l.b16 %v288
    %v319 = vunpack.c.h.b16 %v288
    %v320 = vunpack.c.l.b16 %v289
    %v321 = vunpack.c.h.b16 %v289
    %v322 = vunpack.c.l.b16 %v290
    %v323 = vpack.c.b16 %v302, %v302
    %v324 = vpack.c.b16 %v303, %v303
    %v325 = vpack.c.b16 %v304, %v304
    %v326 = vpack.c.b16 %v305, %v305
    %v327 = vpack.c.b16 %v306, %v306
    %v328 = vpack.c.b16 %v307, %v307
    %v329 = vpack.c.b16 %v308, %v308
    %v330 = vpack.c.b16 %v309, %v309
    %v331 = vpack.c.b16 %v310, %v310
    %v332 = vpack.c.b16 %v311, %v311
    %v333 = vpack.c.b16 %v312, %v312
    %v334 = vpack.c.b16 %v313, %v313
    %v335 = vpack.c.b16 %v314, %v314
    %v336 = vpack.c.b16 %v315, %v315
    %v337 = vpack.c.b16 %v316, %v316
    %v338 = vpack.c.b16 %v317, %v317
    %v339 = vpack.c.b16 %v318, %v318
    %v340 = vpack.c.b16 %v319, %v319
    %v341 = vpack.c.b16 %v320, %v320
    %v342 = vpack.c.b16 %v321, %v321
    %v343 = vpack.c.b16 %v322, %v322
    %365 = vst [vmem:[#allocation2] sm:$0xf] %v323
    %366 = vst [vmem:[#allocation2 + $0x4] sm:$0xf] %v324
    %367 = vst [vmem:[#allocation2 + $0x8] sm:$0xf] %v325
    %368 = vst [vmem:[#allocation2 + $0xc] sm:$0xf] %v326
    %369 = vst [vmem:[#allocation2 + $0x10] sm:$0xf] %v327
    %370 = vst [vmem:[#allocation2 + $0x14] sm:$0xf] %v328
    %371 = vst [vmem:[#allocation2 + $0x18] sm:$0xf] %v329
    %372 = vst [vmem:[#allocation2 + $0x1c] sm:$0xf] %v330
    %373 = vst [vmem:[#allocation2 + $0x20] sm:$0xf] %v331
    %374 = vst [vmem:[#allocation2 + $0x24] sm:$0xf] %v332
    %375 = vst [vmem:[#allocation2 + $0x28] sm:$0xf] %v333
    %376 = vst [vmem:[#allocation2 + $0x2c] sm:$0xf] %v334
    %377 = vst [vmem:[#allocation2 + $0x30] sm:$0xf] %v335
    %378 = vst [vmem:[#allocation2 + $0x34] sm:$0xf] %v336
    %379 = vst [vmem:[#allocation2 + $0x38] sm:$0xf] %v337
    %380 = vst [vmem:[#allocation2 + $0x3c] sm:$0xf] %v338
    %381 = vst [vmem:[#allocation2 + $0x40] sm:$0xf] %v339
    %382 = vst [vmem:[#allocation2 + $0x44] sm:$0xf] %v340
    %383 = vst [vmem:[#allocation2 + $0x48] sm:$0xf] %v341
    %384 = vst [vmem:[#allocation2 + $0x4c] sm:$0xf] %v342
    %385 = vst [vmem:[#allocation2 + $0x50] sm:$0x1] %v343
    // Predicated region
    $region14: #{_mm_affine.1} parent=1 // pred_check
      _
    $region15: #{_mm_affine.1} parent=1 // pred_check_branch
      %387 = sbr.rel (0) target = $region17
    $region16: #{_mm_affine.1} parent=1 // pred_region
      %s389 = ssub.s32 1344, 1344
      %390 = vsyncadd [#allocation3], %s389
      %s391 = sshll.u32 [#allocation2], 4
      %s392 = int_to_ptr.vmem [resolvable:$true] %s391
      %397 = dma.vmem_to_hbm [thread:$0]  %s392, 1344, %s3, [#allocation3], 64, 64, 4
    $region17: #{_mm_affine.1} parent=1 // pred_fallthru
      _
    // Predicated region
    $region18: #{_mm_affine.1} parent=1 // pred_check
      _
    $region19: #{_mm_affine.1} parent=1 // pred_check_branch
      %399 = sbr.rel (0) target = $region21
    $region20: #{_mm_affine.1} parent=1 // pred_region
      %400 = dma.done [#allocation3], 1344
    $region21: #{_mm_affine.1} parent=1 // pred_fallthru
      _
    %401 = vsyncpa [#allocation3], 1

</llo_original>
